<compile_context>
chip_gen: v6e
topology: v6e:2x2x1
jax: 0.10.0
libtpu: 0.0.40
codegen_flags: <defaults>
</compile_context>

<pallas_src>
import functools

import jax
import jax.numpy as jnp
from jax.experimental import pallas as pl
from jax.experimental.pallas import tpu as pltpu


_LANES = 128
_MAX_ROWS_TILE = 512     # multiple of 128 -> lane-dense output stores
_MAX_L_TILE = 1024       # 2 x 512 x 1024 x 4 B = 4 MiB double-buffered input


def _round_up(a: int, b: int) -> int:
    return (a + b - 1) // b * b


def _gap_kernel(x_ref, o_ref, acc_ref, *, inv_l):
    """Accumulate per-row partial sums for one (rows_tile, l_tile) block."""
    k = pl.program_id(1)

    @pl.when(k == 0)
    def _init():
        acc_ref[...] = jnp.zeros_like(acc_ref)

    x = x_ref[...].astype(jnp.float32)            # (rows_tile, l_tile), f32 accum
    n_chunks = x.shape[1] // _LANES
    # Fold the L tile into a 128-lane-wide partial sum with VPU adds only
    # (no per-tile cross-lane XLU reduce).
    partial = x[:, :_LANES]
    for c in range(1, n_chunks):
        partial = partial + x[:, c * _LANES:(c + 1) * _LANES]
    acc_ref[...] += partial

    @pl.when(k == pl.num_programs(1) - 1)
    def _finalize():
        rows = acc_ref.shape[0]
        ones = jnp.ones((8, _LANES), jnp.float32)
        # (8,128) contracted with (rows,128) on the lane axis -> (8, rows):
        # every output row holds the per-row lane sums, already lane-major,
        # so no transpose/relayout is needed for the lane-dense store.
        sums = jax.lax.dot_general(
            ones, acc_ref[...],
            dimension_numbers=(((1,), (1,)), ((), ())),
            preferred_element_type=jnp.float32)
        out_row = (sums[0:1, :] * jnp.float32(inv_l)).astype(o_ref.dtype)
        o_ref[...] = out_row.reshape(1, 1, rows)


def gap_self_attention(x):
    """Pallas equivalent of GAP_self_Attention.forward (AdaptiveAvgPool1d(1)).

    x: (N, C, L) -> (N, C, 1)
    """
    N, C, L = x.shape
    R = N * C
    xf = x.reshape(R, L)                      # free reshape (same memory layout)

    # ---- tile selection --------------------------------------------------
    l_tile = min(_MAX_L_TILE, _round_up(L, _LANES))
    if R >= _LANES:
        rows_tile = min(_MAX_ROWS_TILE, _round_up(R, _LANES))   # lane-dense path
    else:
        rows_tile = _round_up(R, 8)
    L_pad = _round_up(L, l_tile)
    R_pad = _round_up(R, rows_tile)

    if (R_pad != R) or (L_pad != L):
        # Zero pad: padded lanes don't change the sums (we divide by true L);
        # padded rows are sliced off below. Avoids any per-tile tail masking.
        xf = jnp.pad(xf, ((0, R_pad - R), (0, L_pad - L)))

    n_row_tiles = R_pad // rows_tile
    n_l_tiles = L_pad // l_tile

    kernel = functools.partial(_gap_kernel, inv_l=1.0 / L)

    out = pl.pallas_call(
        kernel,
        out_shape=jax.ShapeDtypeStruct((n_row_tiles, 1, rows_tile), x.dtype),
        grid_spec=pltpu.PrefetchScalarGridSpec(
            num_scalar_prefetch=0,
            grid=(n_row_tiles, n_l_tiles),            # reduction (L) axis last
            in_specs=[pl.BlockSpec((rows_tile, l_tile), lambda i, k: (i, k))],
            out_specs=pl.BlockSpec((1, 1, rows_tile), lambda i, k: (i, 0, 0)),
            scratch_shapes=[pltpu.VMEM((rows_tile, _LANES), jnp.float32)],
        ),
        compiler_params=pltpu.CompilerParams(
            dimension_semantics=("parallel", "arbitrary"),
        ),
    )(xf)

    means = out.reshape(R_pad)[:R]
    return means.reshape(N, C, 1)


if __name__ == "__main__":
    key = jax.random.PRNGKey(0)

    # Small shape consistent with the module's forward: (batch, channels, length)
    x = jax.random.normal(key, (2, 4, 16), dtype=jnp.float32)
    out = jax.block_until_ready(gap_self_attention(x))
    ref = jnp.mean(x, axis=-1, keepdims=True)
    assert out.shape == (2, 4, 1), out.shape
    assert jnp.allclose(out, ref, atol=1e-5, rtol=1e-5), "mismatch vs reference"

    # Exercise the lane-dense row path + multiple L tiles + L padding.
    x2 = jax.random.normal(jax.random.PRNGKey(0), (2, 64, 1500), dtype=jnp.float32)
    out2 = jax.block_until_ready(gap_self_attention(x2))
    ref2 = jnp.mean(x2, axis=-1, keepdims=True)
    assert out2.shape == (2, 64, 1)
    assert jnp.allclose(out2, ref2, atol=1e-5, rtol=1e-5), "mismatch (tiled L)"

    # Exercise row padding (N*C not a multiple of 8) + L padding.
    x3 = jax.random.normal(jax.random.PRNGKey(0), (3, 5, 40), dtype=jnp.float32)
    out3 = jax.block_until_ready(gap_self_attention(x3))
    ref3 = jnp.mean(x3, axis=-1, keepdims=True)
    assert out3.shape == (3, 5, 1)
    assert jnp.allclose(out3, ref3, atol=1e-5, rtol=1e-5), "mismatch (padded rows)"

    print("KERNEL_OK")
</pallas_src>

<mosaic_0001>
module attributes {stable_mosaic.version = 11 : i64} {
  func.func @_gap_kernel(%arg0: i32, %arg1: i32, %arg2: memref<8x128xf32, #tpu.memory_space<vmem>>, %arg3: memref<1x1x8xf32, #tpu.memory_space<vmem>>, %arg4: memref<8x128xf32, #tpu.memory_space<vmem>>) attributes {dimension_semantics = [#tpu.dimension_semantics<parallel>, #tpu.dimension_semantics<arbitrary>], iteration_bounds = array<i64: 1, 1>, scalar_prefetch = 0 : i64, scratch_operands = 1 : i64, tpu.core_type = #tpu.core_type<tc>, window_params = [{transform_indices = @transform_0, window_bounds = array<i64: 8, 128>}, {transform_indices = @transform_1, window_bounds = array<i64: 1, 1, 8>}]} {
    %c0_i32 = arith.constant 0 : i32
    %0 = arith.cmpi eq, %arg1, %c0_i32 : i32
    %1 = arith.extui %0 : i1 to i32
    %c0_i32_0 = arith.constant 0 : i32
    %2 = arith.cmpi ne, %1, %c0_i32_0 : i32
    scf.if %2 {
      %cst = arith.constant 0.000000e+00 : f32
      %10 = vector.broadcast %cst : f32 to vector<8x128xf32>
      %c0_8 = arith.constant 0 : index
      %c0_9 = arith.constant 0 : index
      %11 = vector.load %arg4[%c0_8, %c0_9] : memref<8x128xf32, #tpu.memory_space<vmem>>, vector<8x128xf32>
      tpu.vector_store %arg4[%c0_8, %c0_9], %10 {strides = array<i32>} : memref<8x128xf32, #tpu.memory_space<vmem>>, vector<8x128xf32>,
    } else {
    }
    %c0 = arith.constant 0 : index
    %c0_1 = arith.constant 0 : index
    %3 = vector.load %arg2[%c0, %c0_1] : memref<8x128xf32, #tpu.memory_space<vmem>>, vector<8x128xf32>
    %c0_2 = arith.constant 0 : index
    %c0_3 = arith.constant 0 : index
    %4 = vector.load %arg4[%c0_2, %c0_3] : memref<8x128xf32, #tpu.memory_space<vmem>>, vector<8x128xf32>
    %5 = arith.addf %4, %3 : vector<8x128xf32>
    %c0_4 = arith.constant 0 : index
    %c0_5 = arith.constant 0 : index
    %6 = vector.load %arg4[%c0_4, %c0_5] : memref<8x128xf32, #tpu.memory_space<vmem>>, vector<8x128xf32>
    tpu.vector_store %arg4[%c0_4, %c0_5], %5 {strides = array<i32>} : memref<8x128xf32, #tpu.memory_space<vmem>>, vector<8x128xf32>,
    %c0_i32_6 = arith.constant 0 : i32
    %7 = arith.cmpi eq, %arg1, %c0_i32_6 : i32
    %8 = arith.extui %7 : i1 to i32
    %c0_i32_7 = arith.constant 0 : i32
    %9 = arith.cmpi ne, %8, %c0_i32_7 : i32
    scf.if %9 {
      %cst = arith.constant 1.000000e+00 : f32
      %10 = vector.broadcast %cst : f32 to vector<8x128xf32>
      %c0_8 = arith.constant 0 : index
      %c0_9 = arith.constant 0 : index
      %11 = vector.load %arg4[%c0_8, %c0_9] : memref<8x128xf32, #tpu.memory_space<vmem>>, vector<8x128xf32>
      %cst_10 = arith.constant dense<0.000000e+00> : vector<8x8xf32>
      %12 = tpu.matmul %10, %11, %cst_10 {dimension_numbers = #tpu.dot_dimension_numbers<[1], [1], [0], [0], [0, 0, 1, 0], [], []>} : vector<8x128xf32>, vector<8x128xf32>, vector<8x8xf32> -> vector<8x8xf32>
      %13 = vector.extract_strided_slice %12 {offsets = [0, 0], sizes = [1, 8], strides = [1, 1]} : vector<8x8xf32> to vector<1x8xf32>
      %cst_11 = arith.constant 6.250000e-02 : f32
      %14 = vector.broadcast %cst_11 : f32 to vector<1x8xf32>
      %15 = arith.mulf %13, %14 : vector<1x8xf32>
      %16 = vector.shape_cast %15 : vector<1x8xf32> to vector<1x1x8xf32>
      %c0_12 = arith.constant 0 : index
      %c0_13 = arith.constant 0 : index
      %c0_14 = arith.constant 0 : index
      %17 = vector.load %arg3[%c0_12, %c0_13, %c0_14] : memref<1x1x8xf32, #tpu.memory_space<vmem>>, vector<1x1x8xf32>
      tpu.vector_store %arg3[%c0_12, %c0_13, %c0_14], %16 {strides = array<i32>} : memref<1x1x8xf32, #tpu.memory_space<vmem>>, vector<1x1x8xf32>,
    } else {
    }
    return
  }
  func.func @transform_0(%arg0: i32, %arg1: i32) -> (i32, i32) {
    %c0_i32 = arith.constant 0 : i32
    return %arg0, %arg1 : i32, i32
  }
  func.func @transform_1(%arg0: i32, %arg1: i32) -> (i32, i32, i32) {
    %c0_i32 = arith.constant 0 : i32
    %c0_i32_0 = arith.constant 0 : i32
    %c0_i32_1 = arith.constant 0 : i32
    return %arg0, %c0_i32, %c0_i32_0 : i32, i32, i32
  }
}

</mosaic_0001>

<llo_original>
// kernel: tpu_custom_call.1
$region0: #{tpu_custom_call.1}
  #allocation0 [shape = 'u32[]', space=smem, size = 0x4, offset = 0x4, fixed_abs, tag = 'smem constant byte address 0x4 - core index']
  #allocation1 [shape = 'u32[144,128]{1,0:T(1,128)}', space=vmem, size = 0x12000, scoped, tag = 'internal scratch']
  #allocation2 [shape = 'f32[8,128]{1,0:T(8,128)}', space=vmem, size = 0x1000, scoped, tag = 'scratch operand']
  %s0 = inlined_call_operand.hbm [shape: f32[8,128], index: 0, kind: input, shape index: {}]
  %s1 = inlined_call_operand.hbm [shape: f32[1,1,8], index: 1, kind: output, shape index: {}]
  %s2 = sld [smem:[#allocation0]]
  $region26: #{tpu_custom_call.1} parent=0
    _
  %s4 = ssub.s32 1, %s2
  %s5 = scalar_select 0, %s4, %s2
  $region1: #{tpu_custom_call.1} parent=0
    #allocation3 [shape = 'u8[4096]{0}', space=vmem, size = 0x1000, scoped, tag = 'input window, operand 0, single buffered']
    #allocation4 [shape = 's32[1]{0}', space=sflag, size = 0x4, scoped, tag = 'scoped memory for tpu_custom_call.1']
    #allocation5 [shape = 's32[1]{0}', space=sflag, size = 0x4, scoped, tag = 'scoped memory for tpu_custom_call.1']
    #allocation6 [shape = 'u8[512]{0}', space=vmem, size = 0x400, scoped, tag = 'output window, operand 0, single buffered']
    %6 = vsyncpa [#allocation4], 0
    %7 = vsyncpa [#allocation5], 0
    // Predicated region
    $region2: #{tpu_custom_call.1} parent=1 // pred_check
      _
    $region3: #{tpu_custom_call.1} parent=1 // pred_check_branch
      %9 = sbr.rel (0) target = $region5
    $region4: #{tpu_custom_call.1} parent=1 // pred_region
      %s11 = ssub.s32 128, 128
      %12 = vsyncadd [#allocation4], %s11
      %s14 = sshll.u32 [#allocation3], 4
      %s15 = int_to_ptr.vmem [resolvable:$true] %s14
      %17 = dma.hbm_to_vmem [thread:$0]  %s0, 128, %s15, [#allocation4]
    $region5: #{tpu_custom_call.1} parent=1 // pred_fallthru
      _
    // Predicated region
    $region6: #{tpu_custom_call.1} parent=1 // pred_check
      _
    $region7: #{tpu_custom_call.1} parent=1 // pred_check_branch
      %19 = sbr.rel (0) target = $region9
    $region8: #{tpu_custom_call.1} parent=1 // pred_region
      %20 = dma.done [#allocation4], 128
    $region9: #{tpu_custom_call.1} parent=1 // pred_fallthru
      _
    %p21 = scmp.eq.s32.totalorder 0, 0
    // Predicated region
    $region10: #{tpu_custom_call.1} parent=1 // pred_check
      %p22 = pneg %p21
    $region11: #{tpu_custom_call.1} parent=1 // pred_check_branch
      %24 = sbr.rel (%p22) target = $region13
    $region12: #{tpu_custom_call.1} parent=1 // pred_region
      %25 = vst [vmem:[#allocation2] sm:$0xff] 0.0
    $region13: #{tpu_custom_call.1} parent=1 // pred_fallthru
      _
    %v26 = vld [vmem:[#allocation3] sm:$0xff]
    %v27 = vld [vmem:[#allocation2] sm:$0xff]
    %v28 = vadd.f32 %v27, %v26
    %29 = vst [vmem:[#allocation2] sm:$0xff] %v28
    // Predicated region
    $region14: #{tpu_custom_call.1} parent=1 // pred_check
      %p30 = pneg %p21
    $region15: #{tpu_custom_call.1} parent=1 // pred_check_branch
      %32 = sbr.rel (%p30) target = $region17
    $region16: #{tpu_custom_call.1} parent=1 // pred_region
      %v33 = vld [vmem:[#allocation2] sm:$0xff]
      %34 = vmatprep.subr.mxu0 0.0
      %35 = vmatpush1.xpose.msra.mxu0 0.0
      %36 = vmatprep.subr.mxu0 0.0
      %37 = vmatpush1.xpose.msra.mxu0 0.0
      %38 = vmatprep.subr.mxu0 0.0
      %39 = vmatpush1.xpose.msra.mxu0 0.0
      %40 = vmatprep.subr.mxu0 0.0
      %41 = vmatpush1.xpose.msra.mxu0 0.0
      %42 = vmatprep.subr.mxu0 0.0
      %43 = vmatpush1.xpose.msra.mxu0 0.0
      %44 = vmatprep.subr.mxu0 0.0
      %45 = vmatpush1.xpose.msra.mxu0 0.0
      %46 = vmatprep.subr.mxu0 0.0
      %47 = vmatpush1.xpose.msra.mxu0 0.0
      %48 = vmatprep.subr.mxu0 0.0
      %49 = vmatpush1.xpose.msra.mxu0 0.0
      %50 = vmatprep.subr.mxu0 0.0
      %51 = vmatpush1.xpose.msra.mxu0 0.0
      %52 = vmatprep.subr.mxu0 0.0
      %53 = vmatpush1.xpose.msra.mxu0 0.0
      %54 = vmatprep.subr.mxu0 0.0
      %55 = vmatpush1.xpose.msra.mxu0 0.0
      %56 = vmatprep.subr.mxu0 0.0
      %57 = vmatpush1.xpose.msra.mxu0 0.0
      %58 = vmatprep.subr.mxu0 0.0
      %59 = vmatpush1.xpose.msra.mxu0 0.0
      %60 = vmatprep.subr.mxu0 0.0
      %61 = vmatpush1.xpose.msra.mxu0 0.0
      %62 = vmatprep.subr.mxu0 0.0
      %63 = vmatpush1.xpose.msra.mxu0 0.0
      %64 = vmatprep.subr.mxu0 0.0
      %65 = vmatpush1.xpose.msra.mxu0 %v33
      %66 = vmatprep.subr.mxu0 0.0
      %67 = vmatpush2.xpose.msra.mxu0 0.0
      %68 = vmatprep.subr.mxu0 0.0
      %69 = vmatpush2.xpose.msra.mxu0 0.0
      %70 = vmatprep.subr.mxu0 0.0
      %71 = vmatpush2.xpose.msra.mxu0 0.0
      %72 = vmatprep.subr.mxu0 0.0
      %73 = vmatpush2.xpose.msra.mxu0 0.0
      %74 = vmatprep.subr.mxu0 0.0
      %75 = vmatpush2.xpose.msra.mxu0 0.0
      %76 = vmatprep.subr.mxu0 0.0
      %77 = vmatpush2.xpose.msra.mxu0 0.0
      %78 = vmatprep.subr.mxu0 0.0
      %79 = vmatpush2.xpose.msra.mxu0 0.0
      %80 = vmatprep.subr.mxu0 0.0
      %81 = vmatpush2.xpose.msra.mxu0 0.0
      %82 = vmatprep.subr.mxu0 0.0
      %83 = vmatpush2.xpose.msra.mxu0 0.0
      %84 = vmatprep.subr.mxu0 0.0
      %85 = vmatpush2.xpose.msra.mxu0 0.0
      %86 = vmatprep.subr.mxu0 0.0
      %87 = vmatpush2.xpose.msra.mxu0 0.0
      %88 = vmatprep.subr.mxu0 0.0
      %89 = vmatpush2.xpose.msra.mxu0 0.0
      %90 = vmatprep.subr.mxu0 0.0
      %91 = vmatpush2.xpose.msra.mxu0 0.0
      %92 = vmatprep.subr.mxu0 0.0
      %93 = vmatpush2.xpose.msra.mxu0 0.0
      %94 = vmatprep.subr.mxu0 0.0
      %95 = vmatpush2.xpose.msra.mxu0 0.0
      %96 = vmatprep.subr.mxu0 0.0
      %97 = vmatpush2.xpose.msra.mxu0 0.0
      %98 = vmatprep.mubr.f32.mxu0 0.0
      %99 = vmatmul.mubr.f32.gmra.mxu0 1.0
      %v100 = vpop.f32.mrf.mxu0
      %v101 = vadd.f32 0.0, %v100
      %v102 = vpop.f32.mrf.mxu0
      %103 = vdwg.mxu0
      %v104 = vmul.f32 %v101, 0.0625
      %vm105 = vcmask 57344
      %106 = vst.msk [vmem:[#allocation6] sm:$0x1] %vm105, %v104
    $region17: #{tpu_custom_call.1} parent=1 // pred_fallthru
      _
    // Predicated region
    $region18: #{tpu_custom_call.1} parent=1 // pred_check
      _
    $region19: #{tpu_custom_call.1} parent=1 // pred_check_branch
      %108 = sbr.rel (0) target = $region21
    $region20: #{tpu_custom_call.1} parent=1 // pred_region
      %s110 = ssub.s32 16, 16
      %111 = vsyncadd [#allocation5], %s110
      %s113 = sshll.u32 [#allocation6], 4
      %s114 = int_to_ptr.vmem [resolvable:$true] %s113
      %116 = dma.vmem_to_hbm [thread:$0]  %s114, 16, %s1, [#allocation5]
    $region21: #{tpu_custom_call.1} parent=1 // pred_fallthru
      _
    // Predicated region
    $region22: #{tpu_custom_call.1} parent=1 // pred_check
      _
    $region23: #{tpu_custom_call.1} parent=1 // pred_check_branch
      %118 = sbr.rel (0) target = $region25
    $region24: #{tpu_custom_call.1} parent=1 // pred_region
      %119 = dma.done [#allocation5], 16
    $region25: #{tpu_custom_call.1} parent=1 // pred_fallthru
      _
    %120 = vsyncpa [#allocation4], 1
    %121 = vsyncpa [#allocation5], 1

</llo_original>
